<compile_context>
chip_gen: v7x
topology: tpu7x:2x2x1
jax: 0.10.0
libtpu: 0.0.40
codegen_flags: <defaults>
</compile_context>

<pallas_src>
import functools
import math

import jax
import jax.numpy as jnp
from jax import lax
from jax.experimental import pallas as pl
from jax.experimental.pallas import tpu as pltpu


def _round_up(n, m):
    return ((n + m - 1) // m) * m


def _mlp_kernel(n_layers, compute_dtype, x_ref, *refs):
    """Full MLP forward for one batch tile.

    x_ref is (batch_tile, in_N) batch-major; the first dot_general contracts
    over in_N and produces a feature-major (width, batch_tile) activation
    (batch on the lane axis), which stays feature-major through all layers.
    refs = (w0, b0, w1, b1, ..., w_{L-1}, b_{L-1}, out_ref); W_l uses the
    PyTorch nn.Linear (out_features, in_features) layout, b_l is
    (out_features, 1), so each layer is h <- W_l @ h + b_l.
    """
    out_ref = refs[-1]

    w0 = refs[0][...]                                        # (width, in_N)
    b0 = refs[1][...]                                        # (width, 1)
    # (width, in_N) x (bt, in_N) contracted over in_N -> (width, bt)
    acc = lax.dot_general(
        w0, x_ref[...].astype(w0.dtype),
        dimension_numbers=(((1,), (1,)), ((), ())),
        preferred_element_type=jnp.float32)
    acc = acc + b0.astype(jnp.float32)                       # lane broadcast

    if n_layers == 1:                                        # degenerate: head only
        out_ref[...] = acc.astype(out_ref.dtype)
        return

    h = jnp.tanh(acc).astype(compute_dtype)
    for layer in range(1, n_layers):
        w = refs[2 * layer][...]                             # (out_f, in_f)
        b = refs[2 * layer + 1][...]                         # (out_f, 1)
        acc = jnp.dot(w, h, preferred_element_type=jnp.float32)
        acc = acc + b.astype(jnp.float32)
        if layer < n_layers - 1:
            h = jnp.tanh(acc).astype(compute_dtype)
        else:
            out_ref[...] = acc.astype(out_ref.dtype)         # f32 head store


def only_low_forward(x, params, *, batch_tile=4096, compute_dtype=jnp.float32):
    """OnlyLow / NonLinearNet forward.

    x: (B, in_N) float32.
    params: list of (W, b) with W (out_features, in_features) and
            b (out_features, 1)  -- PyTorch nn.Linear layout.
    compute_dtype: jnp.float32 (default, and required on v5e) or
                   jnp.bfloat16 (v6e/v7x); accumulation is always float32.
    """
    assert batch_tile % 128 == 0, "batch_tile must be a multiple of 128"
    B, in_N = x.shape
    out_N = params[-1][0].shape[0]
    n_layers = len(params)

    # Clamp the tile for small batches (don't pad tiny batches to thousands
    # of dead columns), then, if that leaves a single grid step and there is
    # enough batch, halve the tile so the parallel grid has >=2 steps
    # (keeps both v7x TensorCores busy; harmless on v5e/v6e).
    B128 = _round_up(B, 128)
    bt = min(batch_tile, B128)
    if B128 // bt < 2 and B128 >= 256:
        bt = _round_up(pl.cdiv(B128, 2), 128)

    n_tiles = pl.cdiv(B, bt)
    B_pad = n_tiles * bt
    x_p = x if B_pad == B else jnp.pad(x, ((0, B_pad - B), (0, 0)))

    kernel = functools.partial(_mlp_kernel, n_layers, compute_dtype)

    # x / out: batch-tiled.  Weights & biases: tiny, whole-array resident in
    # VMEM (no per-step pipelining).  Weights pre-cast once in the wrapper.
    in_specs = [pl.BlockSpec((bt, in_N), lambda i: (i, 0))]
    flat_params = []
    for w, b in params:
        in_specs.append(pl.BlockSpec(memory_space=pltpu.MemorySpace.VMEM))
        in_specs.append(pl.BlockSpec(memory_space=pltpu.MemorySpace.VMEM))
        flat_params.append(w.astype(compute_dtype))
        flat_params.append(b.astype(jnp.float32))
    out_specs = pl.BlockSpec((out_N, bt), lambda i: (0, i))

    # Advisory cost so XLA does not treat this custom call as zero-cost.
    flops = 2 * B_pad * sum(w.shape[0] * w.shape[1] for w, _ in params)
    transcendentals = B_pad * sum(w.shape[0] for w, _ in params[:-1])
    param_bytes = sum(w.size * w.dtype.itemsize + b.size * b.dtype.itemsize
                      for w, b in params)
    bytes_accessed = 4 * B_pad * (in_N + out_N) + param_bytes

    out_t = pl.pallas_call(
        kernel,
        out_shape=jax.ShapeDtypeStruct((out_N, B_pad), jnp.float32),
        grid_spec=pl.GridSpec(
            grid=(n_tiles,),
            in_specs=in_specs,
            out_specs=out_specs,
        ),
        compiler_params=pltpu.CompilerParams(
            dimension_semantics=("parallel",)),
        cost_estimate=pl.CostEstimate(
            flops=flops,
            transcendentals=transcendentals,
            bytes_accessed=bytes_accessed),
    )(x_p, *flat_params)

    # Slice off the padded batch columns before the writeback transpose.
    return out_t[:, :B].T                                    # (B, out_N)


def init_params(key, in_N, width, depth, out_N, dtype=jnp.float32):
    """Deterministic PyTorch-nn.Linear-style (uniform +-1/sqrt(fan_in)) init.

    Returns W in the PyTorch (out_features, in_features) layout, b as
    (out_features, 1).
    """
    dims = [in_N] + [width] * (depth + 1) + [out_N]
    params = []
    for fan_in, fan_out in zip(dims[:-1], dims[1:]):
        key, kw, kb = jax.random.split(key, 3)
        bound = 1.0 / math.sqrt(fan_in)
        w = jax.random.uniform(kw, (fan_out, fan_in), dtype, -bound, bound)
        b = jax.random.uniform(kb, (fan_out, 1), dtype, -bound, bound)
        params.append((w, b))
    return params


def reference_forward(x, params):
    h = x
    for i, (w, b) in enumerate(params):
        h = h @ w.T + b[:, 0]
        if i < len(params) - 1:
            h = jnp.tanh(h)
    return h


if __name__ == "__main__":
    # ms = [in_N, width, depth, out_N]
    in_N, width, depth, out_N = 4, 32, 3, 2

    key = jax.random.PRNGKey(0)
    params = init_params(key, in_N, width, depth, out_N)

    # Small-batch path (single 128-wide tile, minimal padding).
    key, kx = jax.random.split(key)
    x_small = jax.random.normal(kx, (8, in_N), jnp.float32)
    out_small = jax.block_until_ready(only_low_forward(x_small, params))
    ref_small = reference_forward(x_small, params)
    assert out_small.shape == (8, out_N)
    assert jnp.allclose(out_small, ref_small, atol=1e-4, rtol=1e-4), (
        float(jnp.max(jnp.abs(out_small - ref_small))))

    # Multi-tile path with a ragged tail (exercises >=2 grid steps + padding).
    key, kx = jax.random.split(key)
    x_big = jax.random.normal(kx, (300, in_N), jnp.float32)
    out_big = jax.block_until_ready(
        only_low_forward(x_big, params, batch_tile=256))
    ref_big = reference_forward(x_big, params)
    assert out_big.shape == (300, out_N)
    assert jnp.allclose(out_big, ref_big, atol=1e-4, rtol=1e-4), (
        float(jnp.max(jnp.abs(out_big - ref_big))))

    print("KERNEL_OK")
</pallas_src>

<mosaic_0001>
module attributes {stable_mosaic.version = 11 : i64} {
  func.func @_mlp_kernel(%arg0: i32, %arg1: memref<128x4xf32, #tpu.memory_space<vmem>>, %arg2: memref<32x4xf32, #tpu.memory_space<vmem>>, %arg3: memref<32x1xf32, #tpu.memory_space<vmem>>, %arg4: memref<32x32xf32, #tpu.memory_space<vmem>>, %arg5: memref<32x1xf32, #tpu.memory_space<vmem>>, %arg6: memref<32x32xf32, #tpu.memory_space<vmem>>, %arg7: memref<32x1xf32, #tpu.memory_space<vmem>>, %arg8: memref<32x32xf32, #tpu.memory_space<vmem>>, %arg9: memref<32x1xf32, #tpu.memory_space<vmem>>, %arg10: memref<2x32xf32, #tpu.memory_space<vmem>>, %arg11: memref<2x1xf32, #tpu.memory_space<vmem>>, %arg12: memref<2x128xf32, #tpu.memory_space<vmem>>) attributes {dimension_semantics = [#tpu.dimension_semantics<parallel>], iteration_bounds = array<i64: 1>, scalar_prefetch = 0 : i64, scratch_operands = 0 : i64, tpu.core_type = #tpu.core_type<tc>, window_params = [{transform_indices = @transform_0, window_bounds = array<i64: 128, 4>}, {pipeline_mode = #tpu.pipeline_mode<synchronous>, transform_indices = @transform_1, window_bounds = array<i64: 32, 4>}, {pipeline_mode = #tpu.pipeline_mode<synchronous>, transform_indices = @transform_2, window_bounds = array<i64: 32, 1>}, {pipeline_mode = #tpu.pipeline_mode<synchronous>, transform_indices = @transform_3, window_bounds = array<i64: 32, 32>}, {pipeline_mode = #tpu.pipeline_mode<synchronous>, transform_indices = @transform_4, window_bounds = array<i64: 32, 1>}, {pipeline_mode = #tpu.pipeline_mode<synchronous>, transform_indices = @transform_5, window_bounds = array<i64: 32, 32>}, {pipeline_mode = #tpu.pipeline_mode<synchronous>, transform_indices = @transform_6, window_bounds = array<i64: 32, 1>}, {pipeline_mode = #tpu.pipeline_mode<synchronous>, transform_indices = @transform_7, window_bounds = array<i64: 32, 32>}, {pipeline_mode = #tpu.pipeline_mode<synchronous>, transform_indices = @transform_8, window_bounds = array<i64: 32, 1>}, {pipeline_mode = #tpu.pipeline_mode<synchronous>, transform_indices = @transform_9, window_bounds = array<i64: 2, 32>}, {pipeline_mode = #tpu.pipeline_mode<synchronous>, transform_indices = @transform_10, window_bounds = array<i64: 2, 1>}, {transform_indices = @transform_11, window_bounds = array<i64: 2, 128>}]} {
    %c0 = arith.constant 0 : index
    %c0_0 = arith.constant 0 : index
    %0 = vector.load %arg2[%c0, %c0_0] : memref<32x4xf32, #tpu.memory_space<vmem>>, vector<32x4xf32>
    %c0_1 = arith.constant 0 : index
    %c0_2 = arith.constant 0 : index
    %1 = vector.load %arg3[%c0_1, %c0_2] : memref<32x1xf32, #tpu.memory_space<vmem>>, vector<32x1xf32>
    %c0_3 = arith.constant 0 : index
    %c0_4 = arith.constant 0 : index
    %2 = vector.load %arg1[%c0_3, %c0_4] : memref<128x4xf32, #tpu.memory_space<vmem>>, vector<128x4xf32>
    %cst = arith.constant dense<0.000000e+00> : vector<32x128xf32>
    %3 = tpu.matmul %0, %2, %cst {dimension_numbers = #tpu.dot_dimension_numbers<[1], [1], [0], [0], [0, 0, 1, 0], [], []>} : vector<32x4xf32>, vector<128x4xf32>, vector<32x128xf32> -> vector<32x128xf32>
    %4 = vector.broadcast %1 : vector<32x1xf32> to vector<32x128xf32>
    %5 = arith.addf %3, %4 : vector<32x128xf32>
    %6 = math.tanh %5 : vector<32x128xf32>
    %c0_5 = arith.constant 0 : index
    %c0_6 = arith.constant 0 : index
    %7 = vector.load %arg4[%c0_5, %c0_6] : memref<32x32xf32, #tpu.memory_space<vmem>>, vector<32x32xf32>
    %c0_7 = arith.constant 0 : index
    %c0_8 = arith.constant 0 : index
    %8 = vector.load %arg5[%c0_7, %c0_8] : memref<32x1xf32, #tpu.memory_space<vmem>>, vector<32x1xf32>
    %cst_9 = arith.constant dense<0.000000e+00> : vector<32x128xf32>
    %9 = tpu.matmul %7, %6, %cst_9 {dimension_numbers = #tpu.dot_dimension_numbers<[1], [0], [0], [1], [0, 0, 1, 1], [], []>} : vector<32x32xf32>, vector<32x128xf32>, vector<32x128xf32> -> vector<32x128xf32>
    %10 = vector.broadcast %8 : vector<32x1xf32> to vector<32x128xf32>
    %11 = arith.addf %9, %10 : vector<32x128xf32>
    %12 = math.tanh %11 : vector<32x128xf32>
    %c0_10 = arith.constant 0 : index
    %c0_11 = arith.constant 0 : index
    %13 = vector.load %arg6[%c0_10, %c0_11] : memref<32x32xf32, #tpu.memory_space<vmem>>, vector<32x32xf32>
    %c0_12 = arith.constant 0 : index
    %c0_13 = arith.constant 0 : index
    %14 = vector.load %arg7[%c0_12, %c0_13] : memref<32x1xf32, #tpu.memory_space<vmem>>, vector<32x1xf32>
    %cst_14 = arith.constant dense<0.000000e+00> : vector<32x128xf32>
    %15 = tpu.matmul %13, %12, %cst_14 {dimension_numbers = #tpu.dot_dimension_numbers<[1], [0], [0], [1], [0, 0, 1, 1], [], []>} : vector<32x32xf32>, vector<32x128xf32>, vector<32x128xf32> -> vector<32x128xf32>
    %16 = vector.broadcast %14 : vector<32x1xf32> to vector<32x128xf32>
    %17 = arith.addf %15, %16 : vector<32x128xf32>
    %18 = math.tanh %17 : vector<32x128xf32>
    %c0_15 = arith.constant 0 : index
    %c0_16 = arith.constant 0 : index
    %19 = vector.load %arg8[%c0_15, %c0_16] : memref<32x32xf32, #tpu.memory_space<vmem>>, vector<32x32xf32>
    %c0_17 = arith.constant 0 : index
    %c0_18 = arith.constant 0 : index
    %20 = vector.load %arg9[%c0_17, %c0_18] : memref<32x1xf32, #tpu.memory_space<vmem>>, vector<32x1xf32>
    %cst_19 = arith.constant dense<0.000000e+00> : vector<32x128xf32>
    %21 = tpu.matmul %19, %18, %cst_19 {dimension_numbers = #tpu.dot_dimension_numbers<[1], [0], [0], [1], [0, 0, 1, 1], [], []>} : vector<32x32xf32>, vector<32x128xf32>, vector<32x128xf32> -> vector<32x128xf32>
    %22 = vector.broadcast %20 : vector<32x1xf32> to vector<32x128xf32>
    %23 = arith.addf %21, %22 : vector<32x128xf32>
    %24 = math.tanh %23 : vector<32x128xf32>
    %c0_20 = arith.constant 0 : index
    %c0_21 = arith.constant 0 : index
    %25 = vector.load %arg10[%c0_20, %c0_21] : memref<2x32xf32, #tpu.memory_space<vmem>>, vector<2x32xf32>
    %c0_22 = arith.constant 0 : index
    %c0_23 = arith.constant 0 : index
    %26 = vector.load %arg11[%c0_22, %c0_23] : memref<2x1xf32, #tpu.memory_space<vmem>>, vector<2x1xf32>
    %cst_24 = arith.constant dense<0.000000e+00> : vector<2x128xf32>
    %27 = tpu.matmul %25, %24, %cst_24 {dimension_numbers = #tpu.dot_dimension_numbers<[1], [0], [0], [1], [0, 0, 1, 1], [], []>} : vector<2x32xf32>, vector<32x128xf32>, vector<2x128xf32> -> vector<2x128xf32>
    %28 = vector.broadcast %26 : vector<2x1xf32> to vector<2x128xf32>
    %29 = arith.addf %27, %28 : vector<2x128xf32>
    %c0_25 = arith.constant 0 : index
    %c0_26 = arith.constant 0 : index
    %30 = vector.load %arg12[%c0_25, %c0_26] : memref<2x128xf32, #tpu.memory_space<vmem>>, vector<2x128xf32>
    tpu.vector_store %arg12[%c0_25, %c0_26], %29 {strides = array<i32>} : memref<2x128xf32, #tpu.memory_space<vmem>>, vector<2x128xf32>,
    return
  }
  func.func @transform_0(%arg0: i32) -> (i32, i32) {
    %c0_i32 = arith.constant 0 : i32
    %c0_i32_0 = arith.constant 0 : i32
    return %arg0, %c0_i32 : i32, i32
  }
  func.func @transform_1(%arg0: i32) -> (i32, i32) {
    %c0_i32 = arith.constant 0 : i32
    %c0_i32_0 = arith.constant 0 : i32
    %c0_i32_1 = arith.constant 0 : i32
    return %c0_i32, %c0_i32_0 : i32, i32
  }
  func.func @transform_2(%arg0: i32) -> (i32, i32) {
    %c0_i32 = arith.constant 0 : i32
    %c0_i32_0 = arith.constant 0 : i32
    %c0_i32_1 = arith.constant 0 : i32
    return %c0_i32, %c0_i32_0 : i32, i32
  }
  func.func @transform_3(%arg0: i32) -> (i32, i32) {
    %c0_i32 = arith.constant 0 : i32
    %c0_i32_0 = arith.constant 0 : i32
    %c0_i32_1 = arith.constant 0 : i32
    return %c0_i32, %c0_i32_0 : i32, i32
  }
  func.func @transform_4(%arg0: i32) -> (i32, i32) {
    %c0_i32 = arith.constant 0 : i32
    %c0_i32_0 = arith.constant 0 : i32
    %c0_i32_1 = arith.constant 0 : i32
    return %c0_i32, %c0_i32_0 : i32, i32
  }
  func.func @transform_5(%arg0: i32) -> (i32, i32) {
    %c0_i32 = arith.constant 0 : i32
    %c0_i32_0 = arith.constant 0 : i32
    %c0_i32_1 = arith.constant 0 : i32
    return %c0_i32, %c0_i32_0 : i32, i32
  }
  func.func @transform_6(%arg0: i32) -> (i32, i32) {
    %c0_i32 = arith.constant 0 : i32
    %c0_i32_0 = arith.constant 0 : i32
    %c0_i32_1 = arith.constant 0 : i32
    return %c0_i32, %c0_i32_0 : i32, i32
  }
  func.func @transform_7(%arg0: i32) -> (i32, i32) {
    %c0_i32 = arith.constant 0 : i32
    %c0_i32_0 = arith.constant 0 : i32
    %c0_i32_1 = arith.constant 0 : i32
    return %c0_i32, %c0_i32_0 : i32, i32
  }
  func.func @transform_8(%arg0: i32) -> (i32, i32) {
    %c0_i32 = arith.constant 0 : i32
    %c0_i32_0 = arith.constant 0 : i32
    %c0_i32_1 = arith.constant 0 : i32
    return %c0_i32, %c0_i32_0 : i32, i32
  }
  func.func @transform_9(%arg0: i32) -> (i32, i32) {
    %c0_i32 = arith.constant 0 : i32
    %c0_i32_0 = arith.constant 0 : i32
    %c0_i32_1 = arith.constant 0 : i32
    return %c0_i32, %c0_i32_0 : i32, i32
  }
  func.func @transform_10(%arg0: i32) -> (i32, i32) {
    %c0_i32 = arith.constant 0 : i32
    %c0_i32_0 = arith.constant 0 : i32
    %c0_i32_1 = arith.constant 0 : i32
    return %c0_i32, %c0_i32_0 : i32, i32
  }
  func.func @transform_11(%arg0: i32) -> (i32, i32) {
    %c0_i32 = arith.constant 0 : i32
    %c0_i32_0 = arith.constant 0 : i32
    return %c0_i32, %arg0 : i32, i32
  }
}

</mosaic_0001>

<llo_original>
// kernel: tpu_custom_call.1
$region0: #{tpu_custom_call.1}
  #allocation0 [shape = 'u32[]', space=smem, size = 0x4, offset = 0x4, fixed_abs, tag = 'smem constant byte address 0x4 - core index']
  #allocation1 [shape = 'u32[144,128]{1,0:T(1,128)}', space=vmem, size = 0x12000, scoped, tag = 'internal scratch']
  %s0 = inlined_call_operand.vmem [shape: f32[128,4], index: 0, kind: input, shape index: {}]
  %s1 = inlined_call_operand.vmem [shape: f32[32,4], index: 1, kind: input, shape index: {}]
  %s2 = inlined_call_operand.vmem [shape: f32[32,1], index: 2, kind: input, shape index: {}]
  %s3 = inlined_call_operand.vmem [shape: f32[32,32], index: 3, kind: input, shape index: {}]
  %s4 = inlined_call_operand.vmem [shape: f32[32,1], index: 4, kind: input, shape index: {}]
  %s5 = inlined_call_operand.vmem [shape: f32[32,32], index: 5, kind: input, shape index: {}]
  %s6 = inlined_call_operand.vmem [shape: f32[32,1], index: 6, kind: input, shape index: {}]
  %s7 = inlined_call_operand.vmem [shape: f32[32,32], index: 7, kind: input, shape index: {}]
  %s8 = inlined_call_operand.vmem [shape: f32[32,1], index: 8, kind: input, shape index: {}]
  %s9 = inlined_call_operand.vmem [shape: f32[2,32], index: 9, kind: input, shape index: {}]
  %s10 = inlined_call_operand.vmem [shape: f32[2,1], index: 10, kind: input, shape index: {}]
  %s11 = inlined_call_operand.hbm [shape: f32[2,128], index: 11, kind: output, shape index: {}]
  %s12 = sld [smem:[#allocation0]]
  $region54: #{tpu_custom_call.1} parent=0
    _
  %s14 = ssub.s32 1, %s12
  %s15 = scalar_select 0, %s14, %s12
  $region1: #{tpu_custom_call.1} parent=0
    #allocation2 [shape = 'u8[1024]{0}', space=vmem, size = 0x400, scoped, tag = 'output window, operand 0, single buffered']
    #allocation3 [shape = 's32[1]{0}', space=sflag, size = 0x4, scoped, tag = 'scoped memory for tpu_custom_call.1']
    %16 = vsyncpa [#allocation3], 0
    // Predicated region
    $region2: #{tpu_custom_call.1} parent=1 // pred_check
      _
    $region3: #{tpu_custom_call.1} parent=1 // pred_check_branch
      %18 = sbr.rel (0) target = $region5
    $region4: #{tpu_custom_call.1} parent=1 // pred_region
      _
    $region5: #{tpu_custom_call.1} parent=1 // pred_fallthru
      _
    // Predicated region
    $region6: #{tpu_custom_call.1} parent=1 // pred_check
      _
    $region7: #{tpu_custom_call.1} parent=1 // pred_check_branch
      %20 = sbr.rel (0) target = $region9
    $region8: #{tpu_custom_call.1} parent=1 // pred_region
      _
    $region9: #{tpu_custom_call.1} parent=1 // pred_fallthru
      _
    // Predicated region
    $region10: #{tpu_custom_call.1} parent=1 // pred_check
      _
    $region11: #{tpu_custom_call.1} parent=1 // pred_check_branch
      %22 = sbr.rel (0) target = $region13
    $region12: #{tpu_custom_call.1} parent=1 // pred_region
      _
    $region13: #{tpu_custom_call.1} parent=1 // pred_fallthru
      _
    // Predicated region
    $region14: #{tpu_custom_call.1} parent=1 // pred_check
      _
    $region15: #{tpu_custom_call.1} parent=1 // pred_check_branch
      %24 = sbr.rel (0) target = $region17
    $region16: #{tpu_custom_call.1} parent=1 // pred_region
      _
    $region17: #{tpu_custom_call.1} parent=1 // pred_fallthru
      _
    // Predicated region
    $region18: #{tpu_custom_call.1} parent=1 // pred_check
      _
    $region19: #{tpu_custom_call.1} parent=1 // pred_check_branch
      %26 = sbr.rel (0) target = $region21
    $region20: #{tpu_custom_call.1} parent=1 // pred_region
      _
    $region21: #{tpu_custom_call.1} parent=1 // pred_fallthru
      _
    // Predicated region
    $region22: #{tpu_custom_call.1} parent=1 // pred_check
      _
    $region23: #{tpu_custom_call.1} parent=1 // pred_check_branch
      %28 = sbr.rel (0) target = $region25
    $region24: #{tpu_custom_call.1} parent=1 // pred_region
      _
    $region25: #{tpu_custom_call.1} parent=1 // pred_fallthru
      _
    // Predicated region
    $region26: #{tpu_custom_call.1} parent=1 // pred_check
      _
    $region27: #{tpu_custom_call.1} parent=1 // pred_check_branch
      %30 = sbr.rel (0) target = $region29
    $region28: #{tpu_custom_call.1} parent=1 // pred_region
      _
    $region29: #{tpu_custom_call.1} parent=1 // pred_fallthru
      _
    // Predicated region
    $region30: #{tpu_custom_call.1} parent=1 // pred_check
      _
    $region31: #{tpu_custom_call.1} parent=1 // pred_check_branch
      %32 = sbr.rel (0) target = $region33
    $region32: #{tpu_custom_call.1} parent=1 // pred_region
      _
    $region33: #{tpu_custom_call.1} parent=1 // pred_fallthru
      _
    // Predicated region
    $region34: #{tpu_custom_call.1} parent=1 // pred_check
      _
    $region35: #{tpu_custom_call.1} parent=1 // pred_check_branch
      %34 = sbr.rel (0) target = $region37
    $region36: #{tpu_custom_call.1} parent=1 // pred_region
      _
    $region37: #{tpu_custom_call.1} parent=1 // pred_fallthru
      _
    // Predicated region
    $region38: #{tpu_custom_call.1} parent=1 // pred_check
      _
    $region39: #{tpu_custom_call.1} parent=1 // pred_check_branch
      %36 = sbr.rel (0) target = $region41
    $region40: #{tpu_custom_call.1} parent=1 // pred_region
      _
    $region41: #{tpu_custom_call.1} parent=1 // pred_fallthru
      _
    // Predicated region
    $region42: #{tpu_custom_call.1} parent=1 // pred_check
      _
    $region43: #{tpu_custom_call.1} parent=1 // pred_check_branch
      %38 = sbr.rel (0) target = $region45
    $region44: #{tpu_custom_call.1} parent=1 // pred_region
      _
    $region45: #{tpu_custom_call.1} parent=1 // pred_fallthru
      _
    %v39 = vld [vmem:[%s1] sm:$0xff]
    %v40 = vld [vmem:[%s1 + $0x8] sm:$0xff]
    %v41 = vld [vmem:[%s1 + $0x10] sm:$0xff]
    %v42 = vld [vmem:[%s1 + $0x18] sm:$0xff]
    %v43 = vld [vmem:[%s2] sm:$0xff]
    %v44 = vld [vmem:[%s2 + $0x8] sm:$0xff]
    %v45 = vld [vmem:[%s2 + $0x10] sm:$0xff]
    %v46 = vld [vmem:[%s2 + $0x18] sm:$0xff]
    %v47 = vld [vmem:[%s0] sm:$0xff]
    %v48 = vld [vmem:[%s0 + $0x8] sm:$0xff]
    %v49 = vld [vmem:[%s0 + $0x10] sm:$0xff]
    %v50 = vld [vmem:[%s0 + $0x18] sm:$0xff]
    %v51 = vld [vmem:[%s0 + $0x20] sm:$0xff]
    %v52 = vld [vmem:[%s0 + $0x28] sm:$0xff]
    %v53 = vld [vmem:[%s0 + $0x30] sm:$0xff]
    %v54 = vld [vmem:[%s0 + $0x38] sm:$0xff]
    %v55 = vld [vmem:[%s0 + $0x40] sm:$0xff]
    %v56 = vld [vmem:[%s0 + $0x48] sm:$0xff]
    %v57 = vld [vmem:[%s0 + $0x50] sm:$0xff]
    %v58 = vld [vmem:[%s0 + $0x58] sm:$0xff]
    %v59 = vld [vmem:[%s0 + $0x60] sm:$0xff]
    %v60 = vld [vmem:[%s0 + $0x68] sm:$0xff]
    %v61 = vld [vmem:[%s0 + $0x70] sm:$0xff]
    %v62 = vld [vmem:[%s0 + $0x78] sm:$0xff]
    %64 = vset.pattern.permute.xlu0 0
    %65 = vperm.xlu0 %64, %v43
    %v66 = vpop.permute.xlu0 %65
    %69 = vset.pattern.permute.xlu0 0
    %70 = vperm.xlu0 %69, %v44
    %v71 = vpop.permute.xlu0 %70
    %74 = vset.pattern.permute.xlu0 0
    %75 = vperm.xlu0 %74, %v45
    %v76 = vpop.permute.xlu0 %75
    %79 = vset.pattern.permute.xlu0 0
    %80 = vperm.xlu0 %79, %v46
    %v81 = vpop.permute.xlu0 %80
    %vm83 = vcmask 31744
    %v85 = vsel %vm83, %v39, 0
    %v88 = vsel %vm83, %v40, 0
    %v91 = vsel %vm83, %v41, 0
    %v94 = vsel %vm83, %v42, 0
    %v97 = vsel %vm83, %v47, 0
    %v100 = vsel %vm83, %v48, 0
    %v103 = vsel %vm83, %v49, 0
    %v106 = vsel %vm83, %v50, 0
    %v109 = vsel %vm83, %v51, 0
    %v112 = vsel %vm83, %v52, 0
    %v115 = vsel %vm83, %v53, 0
    %v118 = vsel %vm83, %v54, 0
    %v121 = vsel %vm83, %v55, 0
    %v124 = vsel %vm83, %v56, 0
    %v127 = vsel %vm83, %v57, 0
    %v130 = vsel %vm83, %v58, 0
    %v133 = vsel %vm83, %v59, 0
    %v136 = vsel %vm83, %v60, 0
    %v139 = vsel %vm83, %v61, 0
    %v142 = vsel %vm83, %v62, 0
    %144 = vmatprep.subr.mxu0 0.0
    %145 = vmatpush1.xpose.msra.mxu0 %v97
    %146 = vmatprep.subr.mxu0 0.0
    %147 = vmatpush1.xpose.msra.mxu0 %v100
    %148 = vmatprep.subr.mxu0 0.0
    %149 = vmatpush1.xpose.msra.mxu0 %v103
    %150 = vmatprep.subr.mxu0 0.0
    %151 = vmatpush1.xpose.msra.mxu0 %v106
    %152 = vmatprep.subr.mxu0 0.0
    %153 = vmatpush1.xpose.msra.mxu0 %v109
    %154 = vmatprep.subr.mxu0 0.0
    %155 = vmatpush1.xpose.msra.mxu0 %v112
    %156 = vmatprep.subr.mxu0 0.0
    %157 = vmatpush1.xpose.msra.mxu0 %v115
    %158 = vmatprep.subr.mxu0 0.0
    %159 = vmatpush1.xpose.msra.mxu0 %v118
    %160 = vmatprep.subr.mxu0 0.0
    %161 = vmatpush1.xpose.msra.mxu0 %v121
    %162 = vmatprep.subr.mxu0 0.0
    %163 = vmatpush1.xpose.msra.mxu0 %v124
    %164 = vmatprep.subr.mxu0 0.0
    %165 = vmatpush1.xpose.msra.mxu0 %v127
    %166 = vmatprep.subr.mxu0 0.0
    %167 = vmatpush1.xpose.msra.mxu0 %v130
    %168 = vmatprep.subr.mxu0 0.0
    %169 = vmatpush1.xpose.msra.mxu0 %v133
    %170 = vmatprep.subr.mxu0 0.0
    %171 = vmatpush1.xpose.msra.mxu0 %v136
    %172 = vmatprep.subr.mxu0 0.0
    %173 = vmatpush1.xpose.msra.mxu0 %v139
    %174 = vmatprep.subr.mxu0 0.0
    %175 = vmatpush1.xpose.msra.mxu0 %v142
    %176 = vmatprep.subr.mxu0 0.0
    %177 = vmatpush1.xpose.msra.mxu0 0.0
    %178 = vmatprep.subr.mxu0 0.0
    %179 = vmatpush1.xpose.msra.mxu0 0.0
    %180 = vmatprep.subr.mxu0 0.0
    %181 = vmatpush1.xpose.msra.mxu0 0.0
    %182 = vmatprep.subr.mxu0 0.0
    %183 = vmatpush1.xpose.msra.mxu0 0.0
    %184 = vmatprep.subr.mxu0 0.0
    %185 = vmatpush1.xpose.msra.mxu0 0.0
    %186 = vmatprep.subr.mxu0 0.0
    %187 = vmatpush1.xpose.msra.mxu0 0.0
    %188 = vmatprep.subr.mxu0 0.0
    %189 = vmatpush1.xpose.msra.mxu0 0.0
    %190 = vmatprep.subr.mxu0 0.0
    %191 = vmatpush1.xpose.msra.mxu0 0.0
    %192 = vmatprep.subr.mxu0 0.0
    %193 = vmatpush1.xpose.msra.mxu0 0.0
    %194 = vmatprep.subr.mxu0 0.0
    %195 = vmatpush1.xpose.msra.mxu0 0.0
    %196 = vmatprep.subr.mxu0 0.0
    %197 = vmatpush1.xpose.msra.mxu0 0.0
    %198 = vmatprep.subr.mxu0 0.0
    %199 = vmatpush1.xpose.msra.mxu0 0.0
    %200 = vmatprep.subr.mxu0 0.0
    %201 = vmatpush1.xpose.msra.mxu0 0.0
    %202 = vmatprep.subr.mxu0 0.0
    %203 = vmatpush1.xpose.msra.mxu0 0.0
    %204 = vmatprep.subr.mxu0 0.0
    %205 = vmatpush1.xpose.msra.mxu0 0.0
    %206 = vmatprep.subr.mxu0 0.0
    %207 = vmatpush1.xpose.msra.mxu0 0.0
    %208 = vmatprep.mubr.f32.mxu0 0.0
    %209 = vmatmul.mubr.f32.gmra.mrb[0].mxu0 %v85
    %v210 = vpop.f32.mrb[0].mxu0
    %v211 = vadd.f32 %v66, %v210
    %v212 = vpop.f32.mrb[0].mxu0
    %213 = vmatprep.mubr.f32.mxu0 0.0
    %214 = vmatmul.mubr.f32.gmra.mrb[0].mxu0 %v88
    %v215 = vpop.f32.mrb[0].mxu0
    %v216 = vadd.f32 %v71, %v215
    %v217 = vpop.f32.mrb[0].mxu0
    %218 = vmatprep.mubr.f32.mxu0 0.0
    %219 = vmatmul.mubr.f32.gmra.mrb[0].mxu0 %v91
    %v220 = vpop.f32.mrb[0].mxu0
    %v221 = vadd.f32 %v76, %v220
    %v222 = vpop.f32.mrb[0].mxu0
    %223 = vmatprep.mubr.f32.mxu0 0.0
    %224 = vmatmul.mubr.f32.gmra.mrb[0].mxu0 %v94
    %v225 = vpop.f32.mrb[0].mxu0
    %v226 = vadd.f32 %v81, %v225
    %v227 = vpop.f32.mrb[0].mxu0
    %228 = vdwg.mxu0
    %v229 = vtanh.pop %v211
    %v230 = vtanh.pop %v216
    %v231 = vtanh.pop %v221
    %v232 = vtanh.pop %v226
    %v233 = vld [vmem:[%s3] sm:$0xff]
    %v234 = vld [vmem:[%s3 + $0x8] sm:$0xff]
    %v235 = vld [vmem:[%s3 + $0x10] sm:$0xff]
    %v236 = vld [vmem:[%s3 + $0x18] sm:$0xff]
    %v237 = vld [vmem:[%s4] sm:$0xff]
    %v238 = vld [vmem:[%s4 + $0x8] sm:$0xff]
    %v239 = vld [vmem:[%s4 + $0x10] sm:$0xff]
    %v240 = vld [vmem:[%s4 + $0x18] sm:$0xff]
    %242 = vset.pattern.permute.xlu0 0
    %243 = vperm.xlu0 %242, %v237
    %v244 = vpop.permute.xlu0 %243
    %247 = vset.pattern.permute.xlu0 0
    %248 = vperm.xlu0 %247, %v238
    %v249 = vpop.permute.xlu0 %248
    %252 = vset.pattern.permute.xlu0 0
    %253 = vperm.xlu0 %252, %v239
    %v254 = vpop.permute.xlu0 %253
    %257 = vset.pattern.permute.xlu0 0
    %258 = vperm.xlu0 %257, %v240
    %v259 = vpop.permute.xlu0 %258
    %vm261 = vcmask 261120
    %v263 = vsel %vm261, %v233, 0
    %v266 = vsel %vm261, %v234, 0
    %v269 = vsel %vm261, %v235, 0
    %v272 = vsel %vm261, %v236, 0
    %274 = vmatprep.subr.mxu0 0.0
    %275 = vmatpush1.msra.mxu0 %v229
    %276 = vmatprep.subr.mxu0 0.0
    %277 = vmatpush1.msra.mxu0 %v230
    %278 = vmatprep.subr.mxu0 0.0
    %279 = vmatpush1.msra.mxu0 %v231
    %280 = vmatprep.subr.mxu0 0.0
    %281 = vmatpush1.msra.mxu0 %v232
    %282 = vmatprep.subr.mxu0 0.0
    %283 = vmatpush1.msra.mxu0 0.0
    %284 = vmatprep.subr.mxu0 0.0
    %285 = vmatpush1.msra.mxu0 0.0
    %286 = vmatprep.subr.mxu0 0.0
    %287 = vmatpush1.msra.mxu0 0.0
    %288 = vmatprep.subr.mxu0 0.0
    %289 = vmatpush1.msra.mxu0 0.0
    %290 = vmatprep.subr.mxu0 0.0
    %291 = vmatpush1.msra.mxu0 0.0
    %292 = vmatprep.subr.mxu0 0.0
    %293 = vmatpush1.msra.mxu0 0.0
    %294 = vmatprep.subr.mxu0 0.0
    %295 = vmatpush1.msra.mxu0 0.0
    %296 = vmatprep.subr.mxu0 0.0
    %297 = vmatpush1.msra.mxu0 0.0
    %298 = vmatprep.subr.mxu0 0.0
    %299 = vmatpush1.msra.mxu0 0.0
    %300 = vmatprep.subr.mxu0 0.0
    %301 = vmatpush1.msra.mxu0 0.0
    %302 = vmatprep.subr.mxu0 0.0
    %303 = vmatpush1.msra.mxu0 0.0
    %304 = vmatprep.subr.mxu0 0.0
    %305 = vmatpush1.msra.mxu0 0.0
    %306 = vmatprep.subr.mxu0 0.0
    %307 = vmatpush1.msra.mxu0 0.0
    %308 = vmatprep.subr.mxu0 0.0
    %309 = vmatpush1.msra.mxu0 0.0
    %310 = vmatprep.subr.mxu0 0.0
    %311 = vmatpush1.msra.mxu0 0.0
    %312 = vmatprep.subr.mxu0 0.0
    %313 = vmatpush1.msra.mxu0 0.0
    %314 = vmatprep.subr.mxu0 0.0
    %315 = vmatpush1.msra.mxu0 0.0
    %316 = vmatprep.subr.mxu0 0.0
    %317 = vmatpush1.msra.mxu0 0.0
    %318 = vmatprep.subr.mxu0 0.0
    %319 = vmatpush1.msra.mxu0 0.0
    %320 = vmatprep.subr.mxu0 0.0
    %321 = vmatpush1.msra.mxu0 0.0
    %322 = vmatprep.subr.mxu0 0.0
    %323 = vmatpush1.msra.mxu0 0.0
    %324 = vmatprep.subr.mxu0 0.0
    %325 = vmatpush1.msra.mxu0 0.0
    %326 = vmatprep.subr.mxu0 0.0
    %327 = vmatpush1.msra.mxu0 0.0
    %328 = vmatprep.subr.mxu0 0.0
    %329 = vmatpush1.msra.mxu0 0.0
    %330 = vmatprep.subr.mxu0 0.0
    %331 = vmatpush1.msra.mxu0 0.0
    %332 = vmatprep.subr.mxu0 0.0
    %333 = vmatpush1.msra.mxu0 0.0
    %334 = vmatprep.subr.mxu0 0.0
    %335 = vmatpush1.msra.mxu0 0.0
    %336 = vmatprep.subr.mxu0 0.0
    %337 = vmatpush1.msra.mxu0 0.0
    %338 = vmatprep.mubr.f32.mxu0 0.0
    %339 = vmatmul.mubr.f32.gmra.mrb[0].mxu0 %v263
    %v340 = vpop.f32.mrb[0].mxu0
    %v341 = vadd.f32 %v244, %v340
    %v342 = vpop.f32.mrb[0].mxu0
    %343 = vmatprep.mubr.f32.mxu0 0.0
    %344 = vmatmul.mubr.f32.gmra.mrb[0].mxu0 %v266
    %v345 = vpop.f32.mrb[0].mxu0
    %v346 = vadd.f32 %v249, %v345
    %v347 = vpop.f32.mrb[0].mxu0
    %348 = vmatprep.mubr.f32.mxu0 0.0
    %349 = vmatmul.mubr.f32.gmra.mrb[0].mxu0 %v269
    %v350 = vpop.f32.mrb[0].mxu0
    %v351 = vadd.f32 %v254, %v350
    %v352 = vpop.f32.mrb[0].mxu0
    %353 = vmatprep.mubr.f32.mxu0 0.0
    %354 = vmatmul.mubr.f32.gmra.mrb[0].mxu0 %v272
    %v355 = vpop.f32.mrb[0].mxu0
    %v356 = vadd.f32 %v259, %v355
    %v357 = vpop.f32.mrb[0].mxu0
    %358 = vdwg.mxu0
    %v359 = vtanh.pop %v341
    %v360 = vtanh.pop %v346
    %v361 = vtanh.pop %v351
    %v362 = vtanh.pop %v356
    %v363 = vld [vmem:[%s5] sm:$0xff]
    %v364 = vld [vmem:[%s5 + $0x8] sm:$0xff]
    %v365 = vld [vmem:[%s5 + $0x10] sm:$0xff]
    %v366 = vld [vmem:[%s5 + $0x18] sm:$0xff]
    %v367 = vld [vmem:[%s6] sm:$0xff]
    %v368 = vld [vmem:[%s6 + $0x8] sm:$0xff]
    %v369 = vld [vmem:[%s6 + $0x10] sm:$0xff]
    %v370 = vld [vmem:[%s6 + $0x18] sm:$0xff]
    %372 = vset.pattern.permute.xlu0 0
    %373 = vperm.xlu0 %372, %v367
    %v374 = vpop.permute.xlu0 %373
    %377 = vset.pattern.permute.xlu0 0
    %378 = vperm.xlu0 %377, %v368
    %v379 = vpop.permute.xlu0 %378
    %382 = vset.pattern.permute.xlu0 0
    %383 = vperm.xlu0 %382, %v369
    %v384 = vpop.permute.xlu0 %383
    %387 = vset.pattern.permute.xlu0 0
    %388 = vperm.xlu0 %387, %v370
    %v389 = vpop.permute.xlu0 %388
    %v392 = vsel %vm261, %v363, 0
    %v395 = vsel %vm261, %v364, 0
    %v398 = vsel %vm261, %v365, 0
    %v401 = vsel %vm261, %v366, 0
    %403 = vmatprep.subr.mxu0 0.0
    %404 = vmatpush1.msra.mxu0 %v359
    %405 = vmatprep.subr.mxu0 0.0
    %406 = vmatpush1.msra.mxu0 %v360
    %407 = vmatprep.subr.mxu0 0.0
    %408 = vmatpush1.msra.mxu0 %v361
    %409 = vmatprep.subr.mxu0 0.0
    %410 = vmatpush1.msra.mxu0 %v362
    %411 = vmatprep.subr.mxu0 0.0
    %412 = vmatpush1.msra.mxu0 0.0
    %413 = vmatprep.subr.mxu0 0.0
    %414 = vmatpush1.msra.mxu0 0.0
    %415 = vmatprep.subr.mxu0 0.0
    %416 = vmatpush1.msra.mxu0 0.0
    %417 = vmatprep.subr.mxu0 0.0
    %418 = vmatpush1.msra.mxu0 0.0
    %419 = vmatprep.subr.mxu0 0.0
    %420 = vmatpush1.msra.mxu0 0.0
    %421 = vmatprep.subr.mxu0 0.0
    %422 = vmatpush1.msra.mxu0 0.0
    %423 = vmatprep.subr.mxu0 0.0
    %424 = vmatpush1.msra.mxu0 0.0
    %425 = vmatprep.subr.mxu0 0.0
    %426 = vmatpush1.msra.mxu0 0.0
    %427 = vmatprep.subr.mxu0 0.0
    %428 = vmatpush1.msra.mxu0 0.0
    %429 = vmatprep.subr.mxu0 0.0
    %430 = vmatpush1.msra.mxu0 0.0
    %431 = vmatprep.subr.mxu0 0.0
    %432 = vmatpush1.msra.mxu0 0.0
    %433 = vmatprep.subr.mxu0 0.0
    %434 = vmatpush1.msra.mxu0 0.0
    %435 = vmatprep.subr.mxu0 0.0
    %436 = vmatpush1.msra.mxu0 0.0
    %437 = vmatprep.subr.mxu0 0.0
    %438 = vmatpush1.msra.mxu0 0.0
    %439 = vmatprep.subr.mxu0 0.0
    %440 = vmatpush1.msra.mxu0 0.0
    %441 = vmatprep.subr.mxu0 0.0
    %442 = vmatpush1.msra.mxu0 0.0
    %443 = vmatprep.subr.mxu0 0.0
    %444 = vmatpush1.msra.mxu0 0.0
    %445 = vmatprep.subr.mxu0 0.0
    %446 = vmatpush1.msra.mxu0 0.0
    %447 = vmatprep.subr.mxu0 0.0
    %448 = vmatpush1.msra.mxu0 0.0
    %449 = vmatprep.subr.mxu0 0.0
    %450 = vmatpush1.msra.mxu0 0.0
    %451 = vmatprep.subr.mxu0 0.0
    %452 = vmatpush1.msra.mxu0 0.0
    %453 = vmatprep.subr.mxu0 0.0
    %454 = vmatpush1.msra.mxu0 0.0
    %455 = vmatprep.subr.mxu0 0.0
    %456 = vmatpush1.msra.mxu0 0.0
    %457 = vmatprep.subr.mxu0 0.0
    %458 = vmatpush1.msra.mxu0 0.0
    %459 = vmatprep.subr.mxu0 0.0
    %460 = vmatpush1.msra.mxu0 0.0
    %461 = vmatprep.subr.mxu0 0.0
    %462 = vmatpush1.msra.mxu0 0.0
    %463 = vmatprep.subr.mxu0 0.0
    %464 = vmatpush1.msra.mxu0 0.0
    %465 = vmatprep.subr.mxu0 0.0
    %466 = vmatpush1.msra.mxu0 0.0
    %467 = vmatprep.mubr.f32.mxu0 0.0
    %468 = vmatmul.mubr.f32.gmra.mrb[0].mxu0 %v392
    %v469 = vpop.f32.mrb[0].mxu0
    %v470 = vadd.f32 %v374, %v469
    %v471 = vpop.f32.mrb[0].mxu0
    %472 = vmatprep.mubr.f32.mxu0 0.0
    %473 = vmatmul.mubr.f32.gmra.mrb[0].mxu0 %v395
    %v474 = vpop.f32.mrb[0].mxu0
    %v475 = vadd.f32 %v379, %v474
    %v476 = vpop.f32.mrb[0].mxu0
    %477 = vmatprep.mubr.f32.mxu0 0.0
    %478 = vmatmul.mubr.f32.gmra.mrb[0].mxu0 %v398
    %v479 = vpop.f32.mrb[0].mxu0
    %v480 = vadd.f32 %v384, %v479
    %v481 = vpop.f32.mrb[0].mxu0
    %482 = vmatprep.mubr.f32.mxu0 0.0
    %483 = vmatmul.mubr.f32.gmra.mrb[0].mxu0 %v401
    %v484 = vpop.f32.mrb[0].mxu0
    %v485 = vadd.f32 %v389, %v484
    %v486 = vpop.f32.mrb[0].mxu0
    %487 = vdwg.mxu0
    %v488 = vtanh.pop %v470
    %v489 = vtanh.pop %v475
    %v490 = vtanh.pop %v480
    %v491 = vtanh.pop %v485
    %v492 = vld [vmem:[%s7] sm:$0xff]
    %v493 = vld [vmem:[%s7 + $0x8] sm:$0xff]
    %v494 = vld [vmem:[%s7 + $0x10] sm:$0xff]
    %v495 = vld [vmem:[%s7 + $0x18] sm:$0xff]
    %v496 = vld [vmem:[%s8] sm:$0xff]
    %v497 = vld [vmem:[%s8 + $0x8] sm:$0xff]
    %v498 = vld [vmem:[%s8 + $0x10] sm:$0xff]
    %v499 = vld [vmem:[%s8 + $0x18] sm:$0xff]
    %501 = vset.pattern.permute.xlu0 0
    %502 = vperm.xlu0 %501, %v496
    %v503 = vpop.permute.xlu0 %502
    %506 = vset.pattern.permute.xlu0 0
    %507 = vperm.xlu0 %506, %v497
    %v508 = vpop.permute.xlu0 %507
    %511 = vset.pattern.permute.xlu0 0
    %512 = vperm.xlu0 %511, %v498
    %v513 = vpop.permute.xlu0 %512
    %516 = vset.pattern.permute.xlu0 0
    %517 = vperm.xlu0 %516, %v499
    %v518 = vpop.permute.xlu0 %517
    %v521 = vsel %vm261, %v492, 0
    %v524 = vsel %vm261, %v493, 0
    %v527 = vsel %vm261, %v494, 0
    %v530 = vsel %vm261, %v495, 0
    %532 = vmatprep.subr.mxu0 0.0
    %533 = vmatpush1.msra.mxu0 %v488
    %534 = vmatprep.subr.mxu0 0.0
    %535 = vmatpush1.msra.mxu0 %v489
    %536 = vmatprep.subr.mxu0 0.0
    %537 = vmatpush1.msra.mxu0 %v490
    %538 = vmatprep.subr.mxu0 0.0
    %539 = vmatpush1.msra.mxu0 %v491
    %540 = vmatprep.subr.mxu0 0.0
    %541 = vmatpush1.msra.mxu0 0.0
    %542 = vmatprep.subr.mxu0 0.0
    %543 = vmatpush1.msra.mxu0 0.0
    %544 = vmatprep.subr.mxu0 0.0
    %545 = vmatpush1.msra.mxu0 0.0
    %546 = vmatprep.subr.mxu0 0.0
    %547 = vmatpush1.msra.mxu0 0.0
    %548 = vmatprep.subr.mxu0 0.0
    %549 = vmatpush1.msra.mxu0 0.0
    %550 = vmatprep.subr.mxu0 0.0
    %551 = vmatpush1.msra.mxu0 0.0
    %552 = vmatprep.subr.mxu0 0.0
    %553 = vmatpush1.msra.mxu0 0.0
    %554 = vmatprep.subr.mxu0 0.0
    %555 = vmatpush1.msra.mxu0 0.0
    %556 = vmatprep.subr.mxu0 0.0
    %557 = vmatpush1.msra.mxu0 0.0
    %558 = vmatprep.subr.mxu0 0.0
    %559 = vmatpush1.msra.mxu0 0.0
    %560 = vmatprep.subr.mxu0 0.0
    %561 = vmatpush1.msra.mxu0 0.0
    %562 = vmatprep.subr.mxu0 0.0
    %563 = vmatpush1.msra.mxu0 0.0
    %564 = vmatprep.subr.mxu0 0.0
    %565 = vmatpush1.msra.mxu0 0.0
    %566 = vmatprep.subr.mxu0 0.0
    %567 = vmatpush1.msra.mxu0 0.0
    %568 = vmatprep.subr.mxu0 0.0
    %569 = vmatpush1.msra.mxu0 0.0
    %570 = vmatprep.subr.mxu0 0.0
    %571 = vmatpush1.msra.mxu0 0.0
    %572 = vmatprep.subr.mxu0 0.0
    %573 = vmatpush1.msra.mxu0 0.0
    %574 = vmatprep.subr.mxu0 0.0
    %575 = vmatpush1.msra.mxu0 0.0
    %576 = vmatprep.subr.mxu0 0.0
    %577 = vmatpush1.msra.mxu0 0.0
    %578 = vmatprep.subr.mxu0 0.0
    %579 = vmatpush1.msra.mxu0 0.0
    %580 = vmatprep.subr.mxu0 0.0
    %581 = vmatpush1.msra.mxu0 0.0
    %582 = vmatprep.subr.mxu0 0.0
    %583 = vmatpush1.msra.mxu0 0.0
    %584 = vmatprep.subr.mxu0 0.0
    %585 = vmatpush1.msra.mxu0 0.0
    %586 = vmatprep.subr.mxu0 0.0
    %587 = vmatpush1.msra.mxu0 0.0
    %588 = vmatprep.subr.mxu0 0.0
    %589 = vmatpush1.msra.mxu0 0.0
    %590 = vmatprep.subr.mxu0 0.0
    %591 = vmatpush1.msra.mxu0 0.0
    %592 = vmatprep.subr.mxu0 0.0
    %593 = vmatpush1.msra.mxu0 0.0
    %594 = vmatprep.subr.mxu0 0.0
    %595 = vmatpush1.msra.mxu0 0.0
    %596 = vmatprep.mubr.f32.mxu0 0.0
    %597 = vmatmul.mubr.f32.gmra.mrb[0].mxu0 %v521
    %v598 = vpop.f32.mrb[0].mxu0
    %v599 = vadd.f32 %v503, %v598
    %v600 = vpop.f32.mrb[0].mxu0
    %601 = vmatprep.mubr.f32.mxu0 0.0
    %602 = vmatmul.mubr.f32.gmra.mrb[0].mxu0 %v524
    %v603 = vpop.f32.mrb[0].mxu0
    %v604 = vadd.f32 %v508, %v603
    %v605 = vpop.f32.mrb[0].mxu0
    %606 = vmatprep.mubr.f32.mxu0 0.0
    %607 = vmatmul.mubr.f32.gmra.mrb[0].mxu0 %v527
    %v608 = vpop.f32.mrb[0].mxu0
    %v609 = vadd.f32 %v513, %v608
    %v610 = vpop.f32.mrb[0].mxu0
    %611 = vmatprep.mubr.f32.mxu0 0.0
    %612 = vmatmul.mubr.f32.gmra.mrb[0].mxu0 %v530
    %v613 = vpop.f32.mrb[0].mxu0
    %v614 = vadd.f32 %v518, %v613
    %v615 = vpop.f32.mrb[0].mxu0
    %616 = vdwg.mxu0
    %v617 = vtanh.pop %v599
    %v618 = vtanh.pop %v604
    %v619 = vtanh.pop %v609
    %v620 = vtanh.pop %v614
    %v621 = vld [vmem:[%s9] sm:$0x3]
    %v622 = vld [vmem:[%s10] sm:$0x3]
    %624 = vset.pattern.permute.xlu0 0
    %625 = vperm.xlu0 %624, %v622
    %v626 = vpop.permute.xlu0 %625
    %v629 = vsel %vm261, %v621, 0
    %631 = vmatprep.subr.mxu0 0.0
    %632 = vmatpush1.msra.mxu0 %v617
    %633 = vmatprep.subr.mxu0 0.0
    %634 = vmatpush1.msra.mxu0 %v618
    %635 = vmatprep.subr.mxu0 0.0
    %636 = vmatpush1.msra.mxu0 %v619
    %637 = vmatprep.subr.mxu0 0.0
    %638 = vmatpush1.msra.mxu0 %v620
    %639 = vmatprep.subr.mxu0 0.0
    %640 = vmatpush1.msra.mxu0 0.0
    %641 = vmatprep.subr.mxu0 0.0
    %642 = vmatpush1.msra.mxu0 0.0
    %643 = vmatprep.subr.mxu0 0.0
    %644 = vmatpush1.msra.mxu0 0.0
    %645 = vmatprep.subr.mxu0 0.0
    %646 = vmatpush1.msra.mxu0 0.0
    %647 = vmatprep.subr.mxu0 0.0
    %648 = vmatpush1.msra.mxu0 0.0
    %649 = vmatprep.subr.mxu0 0.0
    %650 = vmatpush1.msra.mxu0 0.0
    %651 = vmatprep.subr.mxu0 0.0
    %652 = vmatpush1.msra.mxu0 0.0
    %653 = vmatprep.subr.mxu0 0.0
    %654 = vmatpush1.msra.mxu0 0.0
    %655 = vmatprep.subr.mxu0 0.0
    %656 = vmatpush1.msra.mxu0 0.0
    %657 = vmatprep.subr.mxu0 0.0
    %658 = vmatpush1.msra.mxu0 0.0
    %659 = vmatprep.subr.mxu0 0.0
    %660 = vmatpush1.msra.mxu0 0.0
    %661 = vmatprep.subr.mxu0 0.0
    %662 = vmatpush1.msra.mxu0 0.0
    %663 = vmatprep.subr.mxu0 0.0
    %664 = vmatpush1.msra.mxu0 0.0
    %665 = vmatprep.subr.mxu0 0.0
    %666 = vmatpush1.msra.mxu0 0.0
    %667 = vmatprep.subr.mxu0 0.0
    %668 = vmatpush1.msra.mxu0 0.0
    %669 = vmatprep.subr.mxu0 0.0
    %670 = vmatpush1.msra.mxu0 0.0
    %671 = vmatprep.subr.mxu0 0.0
    %672 = vmatpush1.msra.mxu0 0.0
    %673 = vmatprep.subr.mxu0 0.0
    %674 = vmatpush1.msra.mxu0 0.0
    %675 = vmatprep.subr.mxu0 0.0
    %676 = vmatpush1.msra.mxu0 0.0
    %677 = vmatprep.subr.mxu0 0.0
    %678 = vmatpush1.msra.mxu0 0.0
    %679 = vmatprep.subr.mxu0 0.0
    %680 = vmatpush1.msra.mxu0 0.0
    %681 = vmatprep.subr.mxu0 0.0
    %682 = vmatpush1.msra.mxu0 0.0
    %683 = vmatprep.subr.mxu0 0.0
    %684 = vmatpush1.msra.mxu0 0.0
    %685 = vmatprep.subr.mxu0 0.0
    %686 = vmatpush1.msra.mxu0 0.0
    %687 = vmatprep.subr.mxu0 0.0
    %688 = vmatpush1.msra.mxu0 0.0
    %689 = vmatprep.subr.mxu0 0.0
    %690 = vmatpush1.msra.mxu0 0.0
    %691 = vmatprep.subr.mxu0 0.0
    %692 = vmatpush1.msra.mxu0 0.0
    %693 = vmatprep.subr.mxu0 0.0
    %694 = vmatpush1.msra.mxu0 0.0
    %695 = vmatprep.mubr.f32.mxu0 0.0
    %696 = vmatmul.mubr.f32.gmra.mrb[0].mxu0 %v629
    %v697 = vpop.f32.mrb[0].mxu0
    %v698 = vadd.f32 %v626, %v697
    %v699 = vpop.f32.mrb[0].mxu0
    %700 = vdwg.mxu0
    %701 = vst [vmem:[#allocation2] sm:$0x3] %v698
    // Predicated region
    $region46: #{tpu_custom_call.1} parent=1 // pred_check
      _
    $region47: #{tpu_custom_call.1} parent=1 // pred_check_branch
      %703 = sbr.rel (0) target = $region49
    $region48: #{tpu_custom_call.1} parent=1 // pred_region
      %s705 = ssub.s32 32, 32
      %706 = vsyncadd [#allocation3], %s705
      %s708 = sshll.u32 [#allocation2], 4
      %s709 = int_to_ptr.vmem [resolvable:$true] %s708
      %711 = dma.vmem_to_hbm [thread:$0]  %s709, 32, %s11, [#allocation3]
    $region49: #{tpu_custom_call.1} parent=1 // pred_fallthru
      _
    // Predicated region
    $region50: #{tpu_custom_call.1} parent=1 // pred_check
      _
    $region51: #{tpu_custom_call.1} parent=1 // pred_check_branch
      %713 = sbr.rel (0) target = $region53
    $region52: #{tpu_custom_call.1} parent=1 // pred_region
      %714 = dma.done [#allocation3], 32
    $region53: #{tpu_custom_call.1} parent=1 // pred_fallthru
      _
    %715 = vsyncpa [#allocation3], 1

</llo_original>
